<compile_context>
chip_gen: v6e
topology: v6e:2x2x1
jax: 0.10.0
libtpu: 0.0.40
codegen_flags: <defaults>
</compile_context>

<pallas_src>
import functools

import jax
import jax.numpy as jnp
from jax.experimental import pallas as pl
from jax.experimental.pallas import tpu as pltpu


def deepset_kernel(x_ref, w1_ref, b1_ref, w2_ref, b2_ref,
                   w3_ref, b3_ref, w4_ref, b4_ref, out_ref, acc_ref,
                   *, n_set, tn, needs_mask):
    k = pl.program_id(1)

    @pl.when(k == 0)
    def _():
        acc_ref[...] = jnp.zeros_like(acc_ref)

    tb, tn_blk, d0 = x_ref.shape
    x = x_ref[...].reshape(tb * tn_blk, d0)            # bf16 (TB*TN, D0)

    # phi: Linear(D0->D1) + ReLU + Linear(D1->D2) + ReLU   (big-M MXU matmuls)
    h1 = jnp.dot(x, w1_ref[...], preferred_element_type=jnp.float32) + b1_ref[...]
    h1 = jnp.maximum(h1, 0.0)                          # f32 (TB*TN, D1)
    h2 = jnp.dot(h1.astype(w2_ref.dtype), w2_ref[...],
                 preferred_element_type=jnp.float32) + b2_ref[...]
    h2 = jnp.maximum(h2, 0.0)                          # f32 (TB*TN, D2)
    h2 = h2.reshape(tb, tn_blk, -1)                    # (TB, TN, D2); TN % 8 == 0

    if needs_mask:
        # Padded set rows are NOT neutral after the biased ReLUs; zero them
        # before pooling.  (Only the last set chunk can contain padding.)
        set_pos = k * tn + jax.lax.broadcasted_iota(jnp.int32, (tb, tn_blk, 1), 1)
        h2 = jnp.where(set_pos < n_set, h2, 0.0)

    # Pooling: f32 partial sum of this set chunk; the 1/N scale is folded into w3.
    acc_ref[...] += jnp.sum(h2, axis=1)                # f32 (TB, D2)

    @pl.when(k == pl.num_programs(1) - 1)
    def _():
        pooled = acc_ref[...]                          # f32 (TB, D2), full-set sum
        # rho: Linear(D2->D1) + ReLU + Linear(D1->D0)
        h3 = jnp.dot(pooled.astype(w3_ref.dtype), w3_ref[...],
                     preferred_element_type=jnp.float32) + b3_ref[...]
        h3 = jnp.maximum(h3, 0.0)                      # f32 (TB, D1)
        h4 = jnp.dot(h3.astype(w4_ref.dtype), w4_ref[...],
                     preferred_element_type=jnp.float32) + b4_ref[...]
        out_ref[...] = h4.astype(out_ref.dtype)        # (TB, D0)


def _round_up(a, m):
    return ((a + m - 1) // m) * m


def _vmem_budget_bytes():
    """Generation-aware usable-VMEM budget (headroom left for compiler scratch)."""
    try:
        cap = pltpu.get_tpu_info().vmem_capacity_bytes   # 64 MiB v7x, 128 MiB v5e/v6e
    except Exception:
        cap = 64 * 1024 * 1024                           # assume the smallest (v7x)
    return int(cap * 0.85)


def deepset_forward(x, params, *, compute_dtype=jnp.bfloat16):
    """x: (B, N, D0) float32. params: dict of f32 weights (in,out) and biases (1,out)."""
    B, N, D0 = x.shape
    D1 = params["w1"].shape[1]
    D2 = params["w2"].shape[1]
    wbytes = jnp.dtype(compute_dtype).itemsize

    vmem_budget = _vmem_budget_bytes()

    # Resident cost independent of tile size (weights/biases, conservatively 2-buffered).
    fixed = (2 * (D0 * D1 + D1 * D2 + D2 * D1 + D1 * D0) * wbytes
             + 2 * (D1 + D2 + D1 + D0) * 4)
    # Per phi-row cost: bf16 x tile (double-buffered) + live f32 h1/h2 activations.
    per_row = 2 * D0 * wbytes + (D1 + D2) * 4

    # Target M (= TB*TN) per grid step: 512-4096 rows, bounded by the VMEM budget.
    rows_cap = max(64, int((vmem_budget * 0.6 - fixed) // per_row))
    rows_target = max(512, min(rows_cap, 4096))

    N_pad8 = _round_up(N, 8)
    B_pad8 = _round_up(B, 8)

    # Batch tile: multiple of 8 (aligned sublanes, unmasked output stores), never
    # padding the batch beyond its next multiple of 8 for tiny B.
    TB = min(_round_up(max(1, rows_target // N_pad8), 8), B_pad8)
    if B_pad8 >= 16:
        # Keep >= 2 batch-grid steps so v7x shards the "parallel" axis over its 2 TCs.
        TB = min(TB, max(8, (B_pad8 // 2) // 8 * 8))
    # Set-dim chunk: multiple of 8 so the in-kernel reshape stays tile-aligned.
    TN = min(N_pad8, max(8, (rows_target // TB) // 8 * 8))

    def est_bytes(tb, tn):
        rows = tb * tn
        return (fixed
                + 2 * rows * D0 * wbytes          # x tile, double-buffered
                + rows * (D1 + D2) * 4            # live f32 activations (h1, h2)
                + tb * D2 * 4                     # pooled accumulator scratch
                + 2 * tb * D0 * 4)                # out tile, double-buffered

    # Feedback loop: shrink TN first, then TB, rather than silently clamping the
    # vmem limit below actual usage (fatal on v7x's 64 MiB).
    while est_bytes(TB, TN) > vmem_budget and (TN > 8 or TB > 8):
        if TN > 8:
            TN = max(8, -(-(TN // 2) // 8) * 8)
        else:
            TB = max(8, -(-(TB // 2) // 8) * 8)

    B_pad = _round_up(B, TB)
    N_pad = _round_up(N, TN)
    needs_mask = N_pad != N

    if (B_pad, N_pad) != (B, N):
        x = jnp.pad(x, ((0, B_pad - B), (0, N_pad - N), (0, 0)))

    # bf16 inputs/weights, f32 biases (bias add / ReLU / pooling stay f32 in-kernel).
    x3d = x.astype(compute_dtype)
    w1 = params["w1"].astype(compute_dtype)
    w2 = params["w2"].astype(compute_dtype)
    w3 = (params["w3"] / N).astype(compute_dtype)   # fold the mean's 1/N into w3
    w4 = params["w4"].astype(compute_dtype)
    b1 = params["b1"].astype(jnp.float32)
    b2 = params["b2"].astype(jnp.float32)
    b3 = params["b3"].astype(jnp.float32)
    b4 = params["b4"].astype(jnp.float32)

    vmem_limit = int(min(vmem_budget, max(2 * est_bytes(TB, TN), 32 * 1024 * 1024)))

    full = lambda shape: pl.BlockSpec(shape, lambda b, k: (0,) * len(shape))
    # TODO(synk): weights/biases could be single-buffered (pipeline_mode) since their
    # index_map is constant; skipped — negligible VMEM at these sizes.

    out = pl.pallas_call(
        functools.partial(deepset_kernel, n_set=N, tn=TN, needs_mask=needs_mask),
        out_shape=jax.ShapeDtypeStruct((B_pad, D0), jnp.float32),
        grid_spec=pltpu.PrefetchScalarGridSpec(
            num_scalar_prefetch=0,
            grid=(B_pad // TB, N_pad // TN),
            in_specs=[
                pl.BlockSpec((TB, TN, D0), lambda b, k: (b, k, 0)),   # x chunk
                full((D0, D1)), full((1, D1)),                        # phi layer 1
                full((D1, D2)), full((1, D2)),                        # phi layer 2
                full((D2, D1)), full((1, D1)),                        # rho layer 1
                full((D1, D0)), full((1, D0)),                        # rho layer 2
            ],
            out_specs=pl.BlockSpec((TB, D0), lambda b, k: (b, 0)),
            scratch_shapes=[pltpu.VMEM((TB, D2), jnp.float32)],       # pooled sum
        ),
        compiler_params=pltpu.CompilerParams(
            dimension_semantics=("parallel", "arbitrary"),
            vmem_limit_bytes=vmem_limit),
    )(x3d, w1, b1, w2, b2, w3, b3, w4, b4)

    return out[:B]


def make_params(key, sizes):
    """Deterministic parameter init. sizes = [D0, D1, D2] as in the PyTorch ctor."""
    D0, D1, D2 = sizes
    ks = jax.random.split(key, 8)

    def lin(kw, kb, fan_in, fan_out):
        bound = 1.0 / jnp.sqrt(fan_in)
        w = jax.random.uniform(kw, (fan_in, fan_out), jnp.float32, -bound, bound)
        b = jax.random.uniform(kb, (1, fan_out), jnp.float32, -bound, bound)
        return w, b

    w1, b1 = lin(ks[0], ks[1], D0, D1)   # phi.0 : Linear(D0, D1)
    w2, b2 = lin(ks[2], ks[3], D1, D2)   # phi.2 : Linear(D1, D2)
    w3, b3 = lin(ks[4], ks[5], D2, D1)   # rho.0 : Linear(D2, D1)
    w4, b4 = lin(ks[6], ks[7], D1, D0)   # rho.2 : Linear(D1, D0)
    return dict(w1=w1, b1=b1, w2=w2, b2=b2, w3=w3, b3=b3, w4=w4, b4=b4)


def deepset_reference(x, p):
    """Pure-JAX f32 reference matching the PyTorch forward."""
    h = jnp.maximum(jnp.einsum("bnd,dk->bnk", x, p["w1"]) + p["b1"], 0.0)
    h = jnp.maximum(jnp.einsum("bnd,dk->bnk", h, p["w2"]) + p["b2"], 0.0)
    s = h.mean(axis=1)
    r = jnp.maximum(s @ p["w3"] + p["b3"][0], 0.0)
    return r @ p["w4"] + p["b4"][0]


if __name__ == "__main__":
    sizes = [32, 64, 128]  # [D0, D1, D2]
    key = jax.random.PRNGKey(0)
    kx, kp, kx2 = jax.random.split(key, 3)
    params = make_params(kp, sizes)

    # Case 1: small, aligned set size (no padding / masking path).
    B, N = 2, 8
    x = jax.random.normal(kx, (B, N, sizes[0]), jnp.float32)
    out = jax.block_until_ready(deepset_forward(x, params))
    ref = deepset_reference(x, params)
    assert out.shape == (B, sizes[0])
    # bf16 inputs/weights with f32 accumulation -> relaxed tolerance vs the f32 reference.
    assert jnp.allclose(out, ref, atol=5e-2, rtol=5e-2), "mismatch vs reference (case 1)"

    # Case 2: unaligned batch & set size — exercises batch padding and the
    # set-dim padding mask applied before the pooled sum.
    B2, N2 = 3, 5
    x2 = jax.random.normal(kx2, (B2, N2, sizes[0]), jnp.float32)
    out2 = jax.block_until_ready(deepset_forward(x2, params))
    ref2 = deepset_reference(x2, params)
    assert out2.shape == (B2, sizes[0])
    assert jnp.allclose(out2, ref2, atol=5e-2, rtol=5e-2), "mismatch vs reference (case 2)"

    print("KERNEL_OK")
</pallas_src>

<mosaic_0001>
module attributes {stable_mosaic.version = 11 : i64} {
  func.func @deepset_kernel(%arg0: i32, %arg1: i32, %arg2: memref<8x8x32xbf16, #tpu.memory_space<vmem>>, %arg3: memref<32x64xbf16, #tpu.memory_space<vmem>>, %arg4: memref<1x64xf32, #tpu.memory_space<vmem>>, %arg5: memref<64x128xbf16, #tpu.memory_space<vmem>>, %arg6: memref<1x128xf32, #tpu.memory_space<vmem>>, %arg7: memref<128x64xbf16, #tpu.memory_space<vmem>>, %arg8: memref<1x64xf32, #tpu.memory_space<vmem>>, %arg9: memref<64x32xbf16, #tpu.memory_space<vmem>>, %arg10: memref<1x32xf32, #tpu.memory_space<vmem>>, %arg11: memref<8x32xf32, #tpu.memory_space<vmem>>, %arg12: memref<8x128xf32, #tpu.memory_space<vmem>>) attributes {dimension_semantics = [#tpu.dimension_semantics<parallel>, #tpu.dimension_semantics<arbitrary>], iteration_bounds = array<i64: 1, 1>, scalar_prefetch = 0 : i64, scratch_operands = 1 : i64, tpu.core_type = #tpu.core_type<tc>, window_params = [{transform_indices = @transform_0, window_bounds = array<i64: 8, 8, 32>}, {pipeline_mode = #tpu.pipeline_mode<synchronous>, transform_indices = @transform_1, window_bounds = array<i64: 32, 64>}, {pipeline_mode = #tpu.pipeline_mode<synchronous>, transform_indices = @transform_2, window_bounds = array<i64: 1, 64>}, {pipeline_mode = #tpu.pipeline_mode<synchronous>, transform_indices = @transform_3, window_bounds = array<i64: 64, 128>}, {pipeline_mode = #tpu.pipeline_mode<synchronous>, transform_indices = @transform_4, window_bounds = array<i64: 1, 128>}, {pipeline_mode = #tpu.pipeline_mode<synchronous>, transform_indices = @transform_5, window_bounds = array<i64: 128, 64>}, {pipeline_mode = #tpu.pipeline_mode<synchronous>, transform_indices = @transform_6, window_bounds = array<i64: 1, 64>}, {pipeline_mode = #tpu.pipeline_mode<synchronous>, transform_indices = @transform_7, window_bounds = array<i64: 64, 32>}, {pipeline_mode = #tpu.pipeline_mode<synchronous>, transform_indices = @transform_8, window_bounds = array<i64: 1, 32>}, {transform_indices = @transform_9, window_bounds = array<i64: 8, 32>}]} {
    %c0_i32 = arith.constant 0 : i32
    %0 = arith.cmpi eq, %arg1, %c0_i32 : i32
    %1 = arith.extui %0 : i1 to i32
    %c0_i32_0 = arith.constant 0 : i32
    %2 = arith.cmpi ne, %1, %c0_i32_0 : i32
    scf.if %2 {
      %cst_21 = arith.constant 0.000000e+00 : f32
      %28 = vector.broadcast %cst_21 : f32 to vector<8x128xf32>
      %c0_22 = arith.constant 0 : index
      %c0_23 = arith.constant 0 : index
      %29 = vector.load %arg12[%c0_22, %c0_23] : memref<8x128xf32, #tpu.memory_space<vmem>>, vector<8x128xf32>
      tpu.vector_store %arg12[%c0_22, %c0_23], %28 {strides = array<i32>} : memref<8x128xf32, #tpu.memory_space<vmem>>, vector<8x128xf32>,
    } else {
    }
    %c0 = arith.constant 0 : index
    %c0_1 = arith.constant 0 : index
    %c0_2 = arith.constant 0 : index
    %3 = vector.load %arg2[%c0, %c0_1, %c0_2] : memref<8x8x32xbf16, #tpu.memory_space<vmem>>, vector<8x8x32xbf16>
    %4 = vector.shape_cast %3 : vector<8x8x32xbf16> to vector<64x32xbf16>
    %c0_3 = arith.constant 0 : index
    %c0_4 = arith.constant 0 : index
    %5 = vector.load %arg3[%c0_3, %c0_4] : memref<32x64xbf16, #tpu.memory_space<vmem>>, vector<32x64xbf16>
    %cst = arith.constant dense<0.000000e+00> : vector<64x64xf32>
    %6 = tpu.matmul %4, %5, %cst {dimension_numbers = #tpu.dot_dimension_numbers<[1], [0], [0], [1], [0, 0, 1, 1], [], []>} : vector<64x32xbf16>, vector<32x64xbf16>, vector<64x64xf32> -> vector<64x64xf32>
    %c0_5 = arith.constant 0 : index
    %c0_6 = arith.constant 0 : index
    %7 = vector.load %arg4[%c0_5, %c0_6] : memref<1x64xf32, #tpu.memory_space<vmem>>, vector<1x64xf32>
    %8 = vector.broadcast %7 : vector<1x64xf32> to vector<64x64xf32>
    %9 = arith.addf %6, %8 : vector<64x64xf32>
    %cst_7 = arith.constant 0.000000e+00 : f32
    %10 = vector.broadcast %cst_7 : f32 to vector<64x64xf32>
    %11 = arith.maximumf %9, %10 : vector<64x64xf32>
    %12 = arith.truncf %11 : vector<64x64xf32> to vector<64x64xbf16>
    %c0_8 = arith.constant 0 : index
    %c0_9 = arith.constant 0 : index
    %13 = vector.load %arg5[%c0_8, %c0_9] : memref<64x128xbf16, #tpu.memory_space<vmem>>, vector<64x128xbf16>
    %cst_10 = arith.constant dense<0.000000e+00> : vector<64x128xf32>
    %14 = tpu.matmul %12, %13, %cst_10 {dimension_numbers = #tpu.dot_dimension_numbers<[1], [0], [0], [1], [0, 0, 1, 1], [], []>} : vector<64x64xbf16>, vector<64x128xbf16>, vector<64x128xf32> -> vector<64x128xf32>
    %c0_11 = arith.constant 0 : index
    %c0_12 = arith.constant 0 : index
    %15 = vector.load %arg6[%c0_11, %c0_12] : memref<1x128xf32, #tpu.memory_space<vmem>>, vector<1x128xf32>
    %16 = vector.broadcast %15 : vector<1x128xf32> to vector<64x128xf32>
    %17 = arith.addf %14, %16 : vector<64x128xf32>
    %cst_13 = arith.constant 0.000000e+00 : f32
    %18 = vector.broadcast %cst_13 : f32 to vector<64x128xf32>
    %19 = arith.maximumf %17, %18 : vector<64x128xf32>
    %20 = vector.shape_cast %19 : vector<64x128xf32> to vector<8x8x128xf32>
    %c0_14 = arith.constant 0 : index
    %c0_15 = arith.constant 0 : index
    %21 = vector.load %arg12[%c0_14, %c0_15] : memref<8x128xf32, #tpu.memory_space<vmem>>, vector<8x128xf32>
    %cst_16 = arith.constant dense<0.000000e+00> : vector<8x128xf32>
    %22 = vector.multi_reduction <add>, %20, %cst_16 [1] : vector<8x8x128xf32> to vector<8x128xf32>
    %23 = arith.addf %21, %22 : vector<8x128xf32>
    %c0_17 = arith.constant 0 : index
    %c0_18 = arith.constant 0 : index
    %24 = vector.load %arg12[%c0_17, %c0_18] : memref<8x128xf32, #tpu.memory_space<vmem>>, vector<8x128xf32>
    tpu.vector_store %arg12[%c0_17, %c0_18], %23 {strides = array<i32>} : memref<8x128xf32, #tpu.memory_space<vmem>>, vector<8x128xf32>,
    %c0_i32_19 = arith.constant 0 : i32
    %25 = arith.cmpi eq, %arg1, %c0_i32_19 : i32
    %26 = arith.extui %25 : i1 to i32
    %c0_i32_20 = arith.constant 0 : i32
    %27 = arith.cmpi ne, %26, %c0_i32_20 : i32
    scf.if %27 {
      %c0_21 = arith.constant 0 : index
      %c0_22 = arith.constant 0 : index
      %28 = vector.load %arg12[%c0_21, %c0_22] : memref<8x128xf32, #tpu.memory_space<vmem>>, vector<8x128xf32>
      %29 = arith.truncf %28 : vector<8x128xf32> to vector<8x128xbf16>
      %c0_23 = arith.constant 0 : index
      %c0_24 = arith.constant 0 : index
      %30 = vector.load %arg7[%c0_23, %c0_24] : memref<128x64xbf16, #tpu.memory_space<vmem>>, vector<128x64xbf16>
      %cst_25 = arith.constant dense<0.000000e+00> : vector<8x64xf32>
      %31 = tpu.matmul %29, %30, %cst_25 {dimension_numbers = #tpu.dot_dimension_numbers<[1], [0], [0], [1], [0, 0, 1, 1], [], []>} : vector<8x128xbf16>, vector<128x64xbf16>, vector<8x64xf32> -> vector<8x64xf32>
      %c0_26 = arith.constant 0 : index
      %c0_27 = arith.constant 0 : index
      %32 = vector.load %arg8[%c0_26, %c0_27] : memref<1x64xf32, #tpu.memory_space<vmem>>, vector<1x64xf32>
      %33 = vector.broadcast %32 : vector<1x64xf32> to vector<8x64xf32>
      %34 = arith.addf %31, %33 : vector<8x64xf32>
      %cst_28 = arith.constant 0.000000e+00 : f32
      %35 = vector.broadcast %cst_28 : f32 to vector<8x64xf32>
      %36 = arith.maximumf %34, %35 : vector<8x64xf32>
      %37 = arith.truncf %36 : vector<8x64xf32> to vector<8x64xbf16>
      %c0_29 = arith.constant 0 : index
      %c0_30 = arith.constant 0 : index
      %38 = vector.load %arg9[%c0_29, %c0_30] : memref<64x32xbf16, #tpu.memory_space<vmem>>, vector<64x32xbf16>
      %cst_31 = arith.constant dense<0.000000e+00> : vector<8x32xf32>
      %39 = tpu.matmul %37, %38, %cst_31 {dimension_numbers = #tpu.dot_dimension_numbers<[1], [0], [0], [1], [0, 0, 1, 1], [], []>} : vector<8x64xbf16>, vector<64x32xbf16>, vector<8x32xf32> -> vector<8x32xf32>
      %c0_32 = arith.constant 0 : index
      %c0_33 = arith.constant 0 : index
      %40 = vector.load %arg10[%c0_32, %c0_33] : memref<1x32xf32, #tpu.memory_space<vmem>>, vector<1x32xf32>
      %41 = vector.broadcast %40 : vector<1x32xf32> to vector<8x32xf32>
      %42 = arith.addf %39, %41 : vector<8x32xf32>
      %c0_34 = arith.constant 0 : index
      %c0_35 = arith.constant 0 : index
      %43 = vector.load %arg11[%c0_34, %c0_35] : memref<8x32xf32, #tpu.memory_space<vmem>>, vector<8x32xf32>
      tpu.vector_store %arg11[%c0_34, %c0_35], %42 {strides = array<i32>} : memref<8x32xf32, #tpu.memory_space<vmem>>, vector<8x32xf32>,
    } else {
    }
    return
  }
  func.func @transform_0(%arg0: i32, %arg1: i32) -> (i32, i32, i32) {
    %c0_i32 = arith.constant 0 : i32
    %c0_i32_0 = arith.constant 0 : i32
    return %arg0, %arg1, %c0_i32 : i32, i32, i32
  }
  func.func @transform_1(%arg0: i32, %arg1: i32) -> (i32, i32) {
    %c0_i32 = arith.constant 0 : i32
    %c0_i32_0 = arith.constant 0 : i32
    %c0_i32_1 = arith.constant 0 : i32
    return %c0_i32, %c0_i32_0 : i32, i32
  }
  func.func @transform_2(%arg0: i32, %arg1: i32) -> (i32, i32) {
    %c0_i32 = arith.constant 0 : i32
    %c0_i32_0 = arith.constant 0 : i32
    %c0_i32_1 = arith.constant 0 : i32
    return %c0_i32, %c0_i32_0 : i32, i32
  }
  func.func @transform_3(%arg0: i32, %arg1: i32) -> (i32, i32) {
    %c0_i32 = arith.constant 0 : i32
    %c0_i32_0 = arith.constant 0 : i32
    %c0_i32_1 = arith.constant 0 : i32
    return %c0_i32, %c0_i32_0 : i32, i32
  }
  func.func @transform_4(%arg0: i32, %arg1: i32) -> (i32, i32) {
    %c0_i32 = arith.constant 0 : i32
    %c0_i32_0 = arith.constant 0 : i32
    %c0_i32_1 = arith.constant 0 : i32
    return %c0_i32, %c0_i32_0 : i32, i32
  }
  func.func @transform_5(%arg0: i32, %arg1: i32) -> (i32, i32) {
    %c0_i32 = arith.constant 0 : i32
    %c0_i32_0 = arith.constant 0 : i32
    %c0_i32_1 = arith.constant 0 : i32
    return %c0_i32, %c0_i32_0 : i32, i32
  }
  func.func @transform_6(%arg0: i32, %arg1: i32) -> (i32, i32) {
    %c0_i32 = arith.constant 0 : i32
    %c0_i32_0 = arith.constant 0 : i32
    %c0_i32_1 = arith.constant 0 : i32
    return %c0_i32, %c0_i32_0 : i32, i32
  }
  func.func @transform_7(%arg0: i32, %arg1: i32) -> (i32, i32) {
    %c0_i32 = arith.constant 0 : i32
    %c0_i32_0 = arith.constant 0 : i32
    %c0_i32_1 = arith.constant 0 : i32
    return %c0_i32, %c0_i32_0 : i32, i32
  }
  func.func @transform_8(%arg0: i32, %arg1: i32) -> (i32, i32) {
    %c0_i32 = arith.constant 0 : i32
    %c0_i32_0 = arith.constant 0 : i32
    %c0_i32_1 = arith.constant 0 : i32
    return %c0_i32, %c0_i32_0 : i32, i32
  }
  func.func @transform_9(%arg0: i32, %arg1: i32) -> (i32, i32) {
    %c0_i32 = arith.constant 0 : i32
    %c0_i32_0 = arith.constant 0 : i32
    return %arg0, %c0_i32 : i32, i32
  }
}

</mosaic_0001>

<llo_original>
// kernel: tpu_custom_call.1
$region0: #{tpu_custom_call.1}
  #allocation0 [shape = 'u32[]', space=smem, size = 0x4, offset = 0x4, fixed_abs, tag = 'smem constant byte address 0x4 - core index']
  #allocation1 [shape = 'u32[144,128]{1,0:T(1,128)}', space=vmem, size = 0x12000, scoped, tag = 'internal scratch']
  #allocation2 [shape = 'f32[8,128]{1,0:T(8,128)}', space=vmem, size = 0x1000, scoped, tag = 'scratch operand']
  %s0 = inlined_call_operand.vmem [shape: bf16[8,8,32], index: 0, kind: input, shape index: {}]
  %s1 = inlined_call_operand.vmem [shape: bf16[32,64], index: 1, kind: input, shape index: {}]
  %s2 = inlined_call_operand.vmem [shape: f32[1,64], index: 2, kind: input, shape index: {}]
  %s3 = inlined_call_operand.vmem [shape: bf16[64,128], index: 3, kind: input, shape index: {}]
  %s4 = inlined_call_operand.vmem [shape: f32[1,128], index: 4, kind: input, shape index: {}]
  %s5 = inlined_call_operand.vmem [shape: bf16[128,64], index: 5, kind: input, shape index: {}]
  %s6 = inlined_call_operand.vmem [shape: f32[1,64], index: 6, kind: input, shape index: {}]
  %s7 = inlined_call_operand.vmem [shape: bf16[64,32], index: 7, kind: input, shape index: {}]
  %s8 = inlined_call_operand.vmem [shape: f32[1,32], index: 8, kind: input, shape index: {}]
  %s9 = inlined_call_operand.hbm [shape: f32[8,32], index: 9, kind: output, shape index: {}]
  %s10 = sld [smem:[#allocation0]]
  $region54: #{tpu_custom_call.1} parent=0
    _
  %s12 = ssub.s32 1, %s10
  %s13 = scalar_select 0, %s12, %s10
  $region1: #{tpu_custom_call.1} parent=0
    #allocation3 [shape = 'u8[4096]{0}', space=vmem, size = 0x1000, scoped, tag = 'output window, operand 0, single buffered']
    #allocation4 [shape = 's32[1]{0}', space=sflag, size = 0x4, scoped, tag = 'scoped memory for tpu_custom_call.1']
    %14 = vsyncpa [#allocation4], 0
    // Predicated region
    $region2: #{tpu_custom_call.1} parent=1 // pred_check
      _
    $region3: #{tpu_custom_call.1} parent=1 // pred_check_branch
      %16 = sbr.rel (0) target = $region5
    $region4: #{tpu_custom_call.1} parent=1 // pred_region
      _
    $region5: #{tpu_custom_call.1} parent=1 // pred_fallthru
      _
    // Predicated region
    $region6: #{tpu_custom_call.1} parent=1 // pred_check
      _
    $region7: #{tpu_custom_call.1} parent=1 // pred_check_branch
      %18 = sbr.rel (0) target = $region9
    $region8: #{tpu_custom_call.1} parent=1 // pred_region
      _
    $region9: #{tpu_custom_call.1} parent=1 // pred_fallthru
      _
    // Predicated region
    $region10: #{tpu_custom_call.1} parent=1 // pred_check
      _
    $region11: #{tpu_custom_call.1} parent=1 // pred_check_branch
      %20 = sbr.rel (0) target = $region13
    $region12: #{tpu_custom_call.1} parent=1 // pred_region
      _
    $region13: #{tpu_custom_call.1} parent=1 // pred_fallthru
      _
    // Predicated region
    $region14: #{tpu_custom_call.1} parent=1 // pred_check
      _
    $region15: #{tpu_custom_call.1} parent=1 // pred_check_branch
      %22 = sbr.rel (0) target = $region17
    $region16: #{tpu_custom_call.1} parent=1 // pred_region
      _
    $region17: #{tpu_custom_call.1} parent=1 // pred_fallthru
      _
    // Predicated region
    $region18: #{tpu_custom_call.1} parent=1 // pred_check
      _
    $region19: #{tpu_custom_call.1} parent=1 // pred_check_branch
      %24 = sbr.rel (0) target = $region21
    $region20: #{tpu_custom_call.1} parent=1 // pred_region
      _
    $region21: #{tpu_custom_call.1} parent=1 // pred_fallthru
      _
    // Predicated region
    $region22: #{tpu_custom_call.1} parent=1 // pred_check
      _
    $region23: #{tpu_custom_call.1} parent=1 // pred_check_branch
      %26 = sbr.rel (0) target = $region25
    $region24: #{tpu_custom_call.1} parent=1 // pred_region
      _
    $region25: #{tpu_custom_call.1} parent=1 // pred_fallthru
      _
    // Predicated region
    $region26: #{tpu_custom_call.1} parent=1 // pred_check
      _
    $region27: #{tpu_custom_call.1} parent=1 // pred_check_branch
      %28 = sbr.rel (0) target = $region29
    $region28: #{tpu_custom_call.1} parent=1 // pred_region
      _
    $region29: #{tpu_custom_call.1} parent=1 // pred_fallthru
      _
    // Predicated region
    $region30: #{tpu_custom_call.1} parent=1 // pred_check
      _
    $region31: #{tpu_custom_call.1} parent=1 // pred_check_branch
      %30 = sbr.rel (0) target = $region33
    $region32: #{tpu_custom_call.1} parent=1 // pred_region
      _
    $region33: #{tpu_custom_call.1} parent=1 // pred_fallthru
      _
    // Predicated region
    $region34: #{tpu_custom_call.1} parent=1 // pred_check
      _
    $region35: #{tpu_custom_call.1} parent=1 // pred_check_branch
      %32 = sbr.rel (0) target = $region37
    $region36: #{tpu_custom_call.1} parent=1 // pred_region
      _
    $region37: #{tpu_custom_call.1} parent=1 // pred_fallthru
      _
    %p34 = scmp.eq.s32.totalorder 0, 0
    // Predicated region
    $region38: #{tpu_custom_call.1} parent=1 // pred_check
      %p35 = pneg %p34
    $region39: #{tpu_custom_call.1} parent=1 // pred_check_branch
      %37 = sbr.rel (%p35) target = $region41
    $region40: #{tpu_custom_call.1} parent=1 // pred_region
      %38 = vst [vmem:[#allocation2] sm:$0xff] 0.0
    $region41: #{tpu_custom_call.1} parent=1 // pred_fallthru
      _
    %v39 = vld [vmem:[%s0] sm:$0xf]
    %v40 = vld [vmem:[%s0 + $0x4] sm:$0xf]
    %v41 = vld [vmem:[%s0 + $0x8] sm:$0xf]
    %v42 = vld [vmem:[%s0 + $0xc] sm:$0xf]
    %v43 = vld [vmem:[%s0 + $0x10] sm:$0xf]
    %v44 = vld [vmem:[%s0 + $0x14] sm:$0xf]
    %v45 = vld [vmem:[%s0 + $0x18] sm:$0xf]
    %v46 = vld [vmem:[%s0 + $0x1c] sm:$0xf]
    %v47 = vld [vmem:[%s1] sm:$0xf]
    %v48 = vld [vmem:[%s1 + $0x4] sm:$0xf]
    %v49 = vld [vmem:[%s1 + $0x8] sm:$0xf]
    %v50 = vld [vmem:[%s1 + $0xc] sm:$0xf]
    %v51 = vld [vmem:[%s2] sm:$0x1]
    %v53 = vlaneseq
    %v54 = vshrl.u32 %v53, 7
    %v55 = vsub.s32 0, %v54
    %v56 = vrot.slane %v51, %v55
    %v66 = vunpack.c.l.b16 %v39
    %v67 = vunpack.c.l.b16 %v40
    %v68 = vunpack.c.l.b16 %v41
    %v69 = vunpack.c.l.b16 %v42
    %v70 = vunpack.c.l.b16 %v43
    %v71 = vunpack.c.l.b16 %v44
    %v72 = vunpack.c.l.b16 %v45
    %v73 = vunpack.c.l.b16 %v46
    %v74 = vpack.c.b16 %v67, %v66
    %v75 = vpack.c.b16 %v69, %v68
    %v76 = vpack.c.b16 %v71, %v70
    %v77 = vpack.c.b16 %v73, %v72
    %v82 = vunpack.c.l.b16 %v47
    %v83 = vunpack.c.l.b16 %v48
    %v84 = vunpack.c.l.b16 %v49
    %v85 = vunpack.c.l.b16 %v50
    %v86 = vpack.c.b16 %v83, %v82
    %v87 = vpack.c.b16 %v85, %v84
    %vm90 = vcmask 261120
    %v92 = vsel %vm90, %v74, 0
    %v95 = vsel %vm90, %v75, 0
    %v98 = vsel %vm90, %v76, 0
    %v101 = vsel %vm90, %v77, 0
    %103 = vmatprep.subr.bf16.mxu0 0
    %104 = vmatpush1.bf16.msra.mxu0 0
    %105 = vmatprep.subr.bf16.mxu0 0
    %106 = vmatpush1.bf16.msra.mxu0 0
    %107 = vmatprep.subr.bf16.mxu0 0
    %108 = vmatpush1.bf16.msra.mxu0 0
    %109 = vmatprep.subr.bf16.mxu0 0
    %110 = vmatpush1.bf16.msra.mxu0 0
    %111 = vmatprep.subr.bf16.mxu0 0
    %112 = vmatpush1.bf16.msra.mxu0 0
    %113 = vmatprep.subr.bf16.mxu0 0
    %114 = vmatpush1.bf16.msra.mxu0 0
    %115 = vmatprep.subr.bf16.mxu0 0
    %116 = vmatpush1.bf16.msra.mxu0 %v87
    %117 = vmatprep.subr.bf16.mxu0 0
    %118 = vmatpush1.bf16.msra.mxu0 %v86
    %119 = vmatprep.subr.bf16.mxu0 0
    %120 = vmatpush2.bf16.msra.mxu0 0
    %121 = vmatprep.subr.bf16.mxu0 0
    %122 = vmatpush2.bf16.msra.mxu0 0
    %123 = vmatprep.subr.bf16.mxu0 0
    %124 = vmatpush2.bf16.msra.mxu0 0
    %125 = vmatprep.subr.bf16.mxu0 0
    %126 = vmatpush2.bf16.msra.mxu0 0
    %127 = vmatprep.subr.bf16.mxu0 0
    %128 = vmatpush2.bf16.msra.mxu0 0
    %129 = vmatprep.subr.bf16.mxu0 0
    %130 = vmatpush2.bf16.msra.mxu0 0
    %131 = vmatprep.subr.bf16.mxu0 0
    %132 = vmatpush2.bf16.msra.mxu0 0
    %133 = vmatprep.subr.bf16.mxu0 0
    %134 = vmatpush2.bf16.msra.mxu0 0
    %135 = vmatprep.mubr.bf16.mxu0 0
    %136 = vmatmul.mubr.bf16.gmra.mxu0 %v92
    %v137 = vpop.f32.mrf.mxu0
    %v138 = vadd.f32 %v56, %v137
    %v139 = vpop.f32.mrf.mxu0
    %v140 = vpop.f32.mrf.mxu0
    %v141 = vadd.f32 %v56, %v140
    %v142 = vpop.f32.mrf.mxu0
    %143 = vmatprep.mubr.bf16.mxu0 0
    %144 = vmatmul.mubr.bf16.gmra.mxu0 %v95
    %v145 = vpop.f32.mrf.mxu0
    %v146 = vadd.f32 %v56, %v145
    %v147 = vpop.f32.mrf.mxu0
    %v148 = vpop.f32.mrf.mxu0
    %v149 = vadd.f32 %v56, %v148
    %v150 = vpop.f32.mrf.mxu0
    %151 = vmatprep.mubr.bf16.mxu0 0
    %152 = vmatmul.mubr.bf16.gmra.mxu0 %v98
    %v153 = vpop.f32.mrf.mxu0
    %v154 = vadd.f32 %v56, %v153
    %v155 = vpop.f32.mrf.mxu0
    %v156 = vpop.f32.mrf.mxu0
    %v157 = vadd.f32 %v56, %v156
    %v158 = vpop.f32.mrf.mxu0
    %159 = vmatprep.mubr.bf16.mxu0 0
    %160 = vmatmul.mubr.bf16.gmra.mxu0 %v101
    %v161 = vpop.f32.mrf.mxu0
    %v162 = vadd.f32 %v56, %v161
    %v163 = vpop.f32.mrf.mxu0
    %v164 = vpop.f32.mrf.mxu0
    %v165 = vadd.f32 %v56, %v164
    %v166 = vpop.f32.mrf.mxu0
    %167 = vdwg.mxu0
    %v168 = vmax.f32 %v138, 0.0
    %v169 = vmax.f32 %v141, 0.0
    %v170 = vmax.f32 %v146, 0.0
    %v171 = vmax.f32 %v149, 0.0
    %v172 = vmax.f32 %v154, 0.0
    %v173 = vmax.f32 %v157, 0.0
    %v174 = vmax.f32 %v162, 0.0
    %v175 = vmax.f32 %v165, 0.0
    %v176 = vpack.c.bf16 %v169, %v168
    %v177 = vpack.c.bf16 %v171, %v170
    %v178 = vpack.c.bf16 %v173, %v172
    %v179 = vpack.c.bf16 %v175, %v174
    %v180 = vld [vmem:[%s3] sm:$0xf]
    %v181 = vld [vmem:[%s3 + $0x4] sm:$0xf]
    %v182 = vld [vmem:[%s3 + $0x8] sm:$0xf]
    %v183 = vld [vmem:[%s3 + $0xc] sm:$0xf]
    %v184 = vld [vmem:[%s3 + $0x10] sm:$0xf]
    %v185 = vld [vmem:[%s3 + $0x14] sm:$0xf]
    %v186 = vld [vmem:[%s3 + $0x18] sm:$0xf]
    %v187 = vld [vmem:[%s3 + $0x1c] sm:$0xf]
    %v188 = vld [vmem:[%s4] sm:$0x1]
    %v190 = vlaneseq
    %v191 = vshrl.u32 %v190, 7
    %v192 = vsub.s32 0, %v191
    %v193 = vrot.slane %v188, %v192
    %v203 = vunpack.c.l.b16 %v180
    %v204 = vunpack.c.l.b16 %v181
    %v205 = vunpack.c.l.b16 %v182
    %v206 = vunpack.c.l.b16 %v183
    %v207 = vunpack.c.l.b16 %v184
    %v208 = vunpack.c.l.b16 %v185
    %v209 = vunpack.c.l.b16 %v186
    %v210 = vunpack.c.l.b16 %v187
    %v211 = vpack.c.b16 %v204, %v203
    %v212 = vpack.c.b16 %v206, %v205
    %v213 = vpack.c.b16 %v208, %v207
    %v214 = vpack.c.b16 %v210, %v209
    %vm219 = vcmask 523264
    %v221 = vsel %vm219, %v176, 0
    %v224 = vsel %vm219, %v177, 0
    %v227 = vsel %vm219, %v178, 0
    %v230 = vsel %vm219, %v179, 0
    %232 = vmatprep.subr.bf16.mxu0 0
    %233 = vmatpush1.bf16.msra.mxu0 0
    %234 = vmatprep.subr.bf16.mxu0 0
    %235 = vmatpush1.bf16.msra.mxu0 0
    %236 = vmatprep.subr.bf16.mxu0 0
    %237 = vmatpush1.bf16.msra.mxu0 0
    %238 = vmatprep.subr.bf16.mxu0 0
    %239 = vmatpush1.bf16.msra.mxu0 0
    %240 = vmatprep.subr.bf16.mxu0 0
    %241 = vmatpush1.bf16.msra.mxu0 %v214
    %242 = vmatprep.subr.bf16.mxu0 0
    %243 = vmatpush1.bf16.msra.mxu0 %v213
    %244 = vmatprep.subr.bf16.mxu0 0
    %245 = vmatpush1.bf16.msra.mxu0 %v212
    %246 = vmatprep.subr.bf16.mxu0 0
    %247 = vmatpush1.bf16.msra.mxu0 %v211
    %248 = vmatprep.subr.bf16.mxu0 0
    %249 = vmatpush2.bf16.msra.mxu0 0
    %250 = vmatprep.subr.bf16.mxu0 0
    %251 = vmatpush2.bf16.msra.mxu0 0
    %252 = vmatprep.subr.bf16.mxu0 0
    %253 = vmatpush2.bf16.msra.mxu0 0
    %254 = vmatprep.subr.bf16.mxu0 0
    %255 = vmatpush2.bf16.msra.mxu0 0
    %256 = vmatprep.subr.bf16.mxu0 0
    %257 = vmatpush2.bf16.msra.mxu0 0
    %258 = vmatprep.subr.bf16.mxu0 0
    %259 = vmatpush2.bf16.msra.mxu0 0
    %260 = vmatprep.subr.bf16.mxu0 0
    %261 = vmatpush2.bf16.msra.mxu0 0
    %262 = vmatprep.subr.bf16.mxu0 0
    %263 = vmatpush2.bf16.msra.mxu0 0
    %264 = vmatprep.mubr.bf16.mxu0 0
    %265 = vmatmul.mubr.bf16.gmra.mxu0 %v221
    %v266 = vpop.f32.mrf.mxu0
    %v267 = vadd.f32 %v193, %v266
    %v268 = vpop.f32.mrf.mxu0
    %v269 = vpop.f32.mrf.mxu0
    %v270 = vadd.f32 %v193, %v269
    %v271 = vpop.f32.mrf.mxu0
    %272 = vmatprep.mubr.bf16.mxu0 0
    %273 = vmatmul.mubr.bf16.gmra.mxu0 %v224
    %v274 = vpop.f32.mrf.mxu0
    %v275 = vadd.f32 %v193, %v274
    %v276 = vpop.f32.mrf.mxu0
    %v277 = vpop.f32.mrf.mxu0
    %v278 = vadd.f32 %v193, %v277
    %v279 = vpop.f32.mrf.mxu0
    %280 = vmatprep.mubr.bf16.mxu0 0
    %281 = vmatmul.mubr.bf16.gmra.mxu0 %v227
    %v282 = vpop.f32.mrf.mxu0
    %v283 = vadd.f32 %v193, %v282
    %v284 = vpop.f32.mrf.mxu0
    %v285 = vpop.f32.mrf.mxu0
    %v286 = vadd.f32 %v193, %v285
    %v287 = vpop.f32.mrf.mxu0
    %288 = vmatprep.mubr.bf16.mxu0 0
    %289 = vmatmul.mubr.bf16.gmra.mxu0 %v230
    %v290 = vpop.f32.mrf.mxu0
    %v291 = vadd.f32 %v193, %v290
    %v292 = vpop.f32.mrf.mxu0
    %v293 = vpop.f32.mrf.mxu0
    %v294 = vadd.f32 %v193, %v293
    %v295 = vpop.f32.mrf.mxu0
    %296 = vdwg.mxu0
    %v297 = vmax.f32 %v267, 0.0
    %v298 = vmax.f32 %v270, 0.0
    %v299 = vmax.f32 %v275, 0.0
    %v300 = vmax.f32 %v278, 0.0
    %v301 = vmax.f32 %v283, 0.0
    %v302 = vmax.f32 %v286, 0.0
    %v303 = vmax.f32 %v291, 0.0
    %v304 = vmax.f32 %v294, 0.0
    %v305 = vld [vmem:[#allocation2] sm:$0xff]
    %v306 = vrot.slane %v297, 4
    %v307 = vadd.f32 %v297, %v306
    %v308 = vrot.slane %v307, 2
    %v309 = vadd.f32 %v307, %v308
    %v310 = vrot.slane %v309, 1
    %v311 = vadd.f32 %v309, %v310
    %v312 = vrot.slane %v298, 4
    %v313 = vadd.f32 %v298, %v312
    %v314 = vrot.slane %v313, 2
    %v315 = vadd.f32 %v313, %v314
    %v316 = vrot.slane %v315, 1
    %v317 = vadd.f32 %v315, %v316
    %v318 = vrot.slane %v299, 4
    %v319 = vadd.f32 %v299, %v318
    %v320 = vrot.slane %v319, 2
    %v321 = vadd.f32 %v319, %v320
    %v322 = vrot.slane %v321, 1
    %v323 = vadd.f32 %v321, %v322
    %v324 = vrot.slane %v300, 4
    %v325 = vadd.f32 %v300, %v324
    %v326 = vrot.slane %v325, 2
    %v327 = vadd.f32 %v325, %v326
    %v328 = vrot.slane %v327, 1
    %v329 = vadd.f32 %v327, %v328
    %v330 = vrot.slane %v301, 4
    %v331 = vadd.f32 %v301, %v330
    %v332 = vrot.slane %v331, 2
    %v333 = vadd.f32 %v331, %v332
    %v334 = vrot.slane %v333, 1
    %v335 = vadd.f32 %v333, %v334
    %v336 = vrot.slane %v302, 4
    %v337 = vadd.f32 %v302, %v336
    %v338 = vrot.slane %v337, 2
    %v339 = vadd.f32 %v337, %v338
    %v340 = vrot.slane %v339, 1
    %v341 = vadd.f32 %v339, %v340
    %v342 = vrot.slane %v303, 4
    %v343 = vadd.f32 %v303, %v342
    %v344 = vrot.slane %v343, 2
    %v345 = vadd.f32 %v343, %v344
    %v346 = vrot.slane %v345, 1
    %v347 = vadd.f32 %v345, %v346
    %v348 = vrot.slane %v304, 4
    %v349 = vadd.f32 %v304, %v348
    %v350 = vrot.slane %v349, 2
    %v351 = vadd.f32 %v349, %v350
    %v352 = vrot.slane %v351, 1
    %v353 = vadd.f32 %v351, %v352
    %vm362 = vcmask 1041409
    %v363 = vsel %vm362, %v317, %v311
    %vm364 = vcmask 1042434
    %v365 = vsel %vm364, %v323, %v363
    %vm366 = vcmask 1043459
    %v367 = vsel %vm366, %v329, %v365
    %vm368 = vcmask 1044484
    %v369 = vsel %vm368, %v335, %v367
    %vm370 = vcmask 1045509
    %v371 = vsel %vm370, %v341, %v369
    %vm372 = vcmask 1046534
    %v373 = vsel %vm372, %v347, %v371
    %vm374 = vcmask 1047559
    %v375 = vsel %vm374, %v353, %v373
    %v377 = vadd.f32 %v305, %v375
    %378 = vst [vmem:[#allocation2] sm:$0xff] %v377
    // Predicated region
    $region42: #{tpu_custom_call.1} parent=1 // pred_check
      %p379 = pneg %p34
    $region43: #{tpu_custom_call.1} parent=1 // pred_check_branch
      %381 = sbr.rel (%p379) target = $region45
    $region44: #{tpu_custom_call.1} parent=1 // pred_region
      %v382 = vld [vmem:[#allocation2] sm:$0xff]
      %v383 = vpack.c.bf16 %v382, %v382
      %v384 = vld [vmem:[%s5] sm:$0xf]
      %v385 = vld [vmem:[%s5 + $0x4] sm:$0xf]
      %v386 = vld [vmem:[%s5 + $0x8] sm:$0xf]
      %v387 = vld [vmem:[%s5 + $0xc] sm:$0xf]
      %v388 = vld [vmem:[%s5 + $0x10] sm:$0xf]
      %v389 = vld [vmem:[%s5 + $0x14] sm:$0xf]
      %v390 = vld [vmem:[%s5 + $0x18] sm:$0xf]
      %v391 = vld [vmem:[%s5 + $0x1c] sm:$0xf]
      %v392 = vld [vmem:[%s5 + $0x20] sm:$0xf]
      %v393 = vld [vmem:[%s5 + $0x24] sm:$0xf]
      %v394 = vld [vmem:[%s5 + $0x28] sm:$0xf]
      %v395 = vld [vmem:[%s5 + $0x2c] sm:$0xf]
      %v396 = vld [vmem:[%s5 + $0x30] sm:$0xf]
      %v397 = vld [vmem:[%s5 + $0x34] sm:$0xf]
      %v398 = vld [vmem:[%s5 + $0x38] sm:$0xf]
      %v399 = vld [vmem:[%s5 + $0x3c] sm:$0xf]
      %v400 = vld [vmem:[%s6] sm:$0x1]
      %v402 = vlaneseq
      %v403 = vshrl.u32 %v402, 7
      %v404 = vsub.s32 0, %v403
      %v405 = vrot.slane %v400, %v404
      %v423 = vunpack.c.l.b16 %v384
      %v424 = vunpack.c.l.b16 %v385
      %v425 = vunpack.c.l.b16 %v386
      %v426 = vunpack.c.l.b16 %v387
      %v427 = vunpack.c.l.b16 %v388
      %v428 = vunpack.c.l.b16 %v389
      %v429 = vunpack.c.l.b16 %v390
      %v430 = vunpack.c.l.b16 %v391
      %v431 = vunpack.c.l.b16 %v392
      %v432 = vunpack.c.l.b16 %v393
      %v433 = vunpack.c.l.b16 %v394
      %v434 = vunpack.c.l.b16 %v395
      %v435 = vunpack.c.l.b16 %v396
      %v436 = vunpack.c.l.b16 %v397
      %v437 = vunpack.c.l.b16 %v398
      %v438 = vunpack.c.l.b16 %v399
      %v439 = vpack.c.b16 %v424, %v423
      %v440 = vpack.c.b16 %v426, %v425
      %v441 = vpack.c.b16 %v428, %v427
      %v442 = vpack.c.b16 %v430, %v429
      %v443 = vpack.c.b16 %v432, %v431
      %v444 = vpack.c.b16 %v434, %v433
      %v445 = vpack.c.b16 %v436, %v435
      %v446 = vpack.c.b16 %v438, %v437
      %455 = vmatprep.subr.bf16.mxu0 0
      %456 = vmatpush1.bf16.msra.mxu0 %v446
      %457 = vmatprep.subr.bf16.mxu0 0
      %458 = vmatpush1.bf16.msra.mxu0 %v445
      %459 = vmatprep.subr.bf16.mxu0 0
      %460 = vmatpush1.bf16.msra.mxu0 %v444
      %461 = vmatprep.subr.bf16.mxu0 0
      %462 = vmatpush1.bf16.msra.mxu0 %v443
      %463 = vmatprep.subr.bf16.mxu0 0
      %464 = vmatpush1.bf16.msra.mxu0 %v442
      %465 = vmatprep.subr.bf16.mxu0 0
      %466 = vmatpush1.bf16.msra.mxu0 %v441
      %467 = vmatprep.subr.bf16.mxu0 0
      %468 = vmatpush1.bf16.msra.mxu0 %v440
      %469 = vmatprep.subr.bf16.mxu0 0
      %470 = vmatpush1.bf16.msra.mxu0 %v439
      %471 = vmatprep.subr.bf16.mxu0 0
      %472 = vmatpush2.bf16.msra.mxu0 0
      %473 = vmatprep.subr.bf16.mxu0 0
      %474 = vmatpush2.bf16.msra.mxu0 0
      %475 = vmatprep.subr.bf16.mxu0 0
      %476 = vmatpush2.bf16.msra.mxu0 0
      %477 = vmatprep.subr.bf16.mxu0 0
      %478 = vmatpush2.bf16.msra.mxu0 0
      %479 = vmatprep.subr.bf16.mxu0 0
      %480 = vmatpush2.bf16.msra.mxu0 0
      %481 = vmatprep.subr.bf16.mxu0 0
      %482 = vmatpush2.bf16.msra.mxu0 0
      %483 = vmatprep.subr.bf16.mxu0 0
      %484 = vmatpush2.bf16.msra.mxu0 0
      %485 = vmatprep.subr.bf16.mxu0 0
      %486 = vmatpush2.bf16.msra.mxu0 0
      %487 = vmatprep.mubr.bf16.mxu0 0
      %488 = vmatmul.mubr.bf16.gmra.mxu0 %v383
      %v489 = vpop.f32.mrf.mxu0
      %v490 = vadd.f32 %v405, %v489
      %v491 = vpop.f32.mrf.mxu0
      %v492 = vpop.f32.mrf.mxu0
      %v493 = vpop.f32.mrf.mxu0
      %494 = vdwg.mxu0
      %v495 = vmax.f32 %v490, 0.0
      %v496 = vpack.c.bf16 %v495, %v495
      %v497 = vld [vmem:[%s7] sm:$0xf]
      %v498 = vld [vmem:[%s7 + $0x4] sm:$0xf]
      %v499 = vld [vmem:[%s7 + $0x8] sm:$0xf]
      %v500 = vld [vmem:[%s7 + $0xc] sm:$0xf]
      %v501 = vld [vmem:[%s7 + $0x10] sm:$0xf]
      %v502 = vld [vmem:[%s7 + $0x14] sm:$0xf]
      %v503 = vld [vmem:[%s7 + $0x18] sm:$0xf]
      %v504 = vld [vmem:[%s7 + $0x1c] sm:$0xf]
      %v505 = vld [vmem:[%s8] sm:$0x1]
      %v507 = vlaneseq
      %v508 = vshrl.u32 %v507, 7
      %v509 = vsub.s32 0, %v508
      %v510 = vrot.slane %v505, %v509
      %v520 = vunpack.c.l.b16 %v497
      %v521 = vunpack.c.l.b16 %v498
      %v522 = vunpack.c.l.b16 %v499
      %v523 = vunpack.c.l.b16 %v500
      %v524 = vunpack.c.l.b16 %v501
      %v525 = vunpack.c.l.b16 %v502
      %v526 = vunpack.c.l.b16 %v503
      %v527 = vunpack.c.l.b16 %v504
      %v528 = vpack.c.b16 %v521, %v520
      %v529 = vpack.c.b16 %v523, %v522
      %v530 = vpack.c.b16 %v525, %v524
      %v531 = vpack.c.b16 %v527, %v526
      %v537 = vsel %vm219, %v496, 0
      %539 = vmatprep.subr.bf16.mxu0 0
      %540 = vmatpush1.bf16.msra.mxu0 0
      %541 = vmatprep.subr.bf16.mxu0 0
      %542 = vmatpush1.bf16.msra.mxu0 0
      %543 = vmatprep.subr.bf16.mxu0 0
      %544 = vmatpush1.bf16.msra.mxu0 0
      %545 = vmatprep.subr.bf16.mxu0 0
      %546 = vmatpush1.bf16.msra.mxu0 0
      %547 = vmatprep.subr.bf16.mxu0 0
      %548 = vmatpush1.bf16.msra.mxu0 %v531
      %549 = vmatprep.subr.bf16.mxu0 0
      %550 = vmatpush1.bf16.msra.mxu0 %v530
      %551 = vmatprep.subr.bf16.mxu0 0
      %552 = vmatpush1.bf16.msra.mxu0 %v529
      %553 = vmatprep.subr.bf16.mxu0 0
      %554 = vmatpush1.bf16.msra.mxu0 %v528
      %555 = vmatprep.subr.bf16.mxu0 0
      %556 = vmatpush2.bf16.msra.mxu0 0
      %557 = vmatprep.subr.bf16.mxu0 0
      %558 = vmatpush2.bf16.msra.mxu0 0
      %559 = vmatprep.subr.bf16.mxu0 0
      %560 = vmatpush2.bf16.msra.mxu0 0
      %561 = vmatprep.subr.bf16.mxu0 0
      %562 = vmatpush2.bf16.msra.mxu0 0
      %563 = vmatprep.subr.bf16.mxu0 0
      %564 = vmatpush2.bf16.msra.mxu0 0
      %565 = vmatprep.subr.bf16.mxu0 0
      %566 = vmatpush2.bf16.msra.mxu0 0
      %567 = vmatprep.subr.bf16.mxu0 0
      %568 = vmatpush2.bf16.msra.mxu0 0
      %569 = vmatprep.subr.bf16.mxu0 0
      %570 = vmatpush2.bf16.msra.mxu0 0
      %571 = vmatprep.mubr.bf16.mxu0 0
      %572 = vmatmul.mubr.bf16.gmra.mxu0 %v537
      %v573 = vpop.f32.mrf.mxu0
      %v574 = vadd.f32 %v510, %v573
      %v575 = vpop.f32.mrf.mxu0
      %v576 = vpop.f32.mrf.mxu0
      %v577 = vpop.f32.mrf.mxu0
      %578 = vdwg.mxu0
      %579 = vst.msk [vmem:[#allocation3] sm:$0xff] %vm90, %v574
    $region45: #{tpu_custom_call.1} parent=1 // pred_fallthru
      _
    // Predicated region
    $region46: #{tpu_custom_call.1} parent=1 // pred_check
      _
    $region47: #{tpu_custom_call.1} parent=1 // pred_check_branch
      %581 = sbr.rel (0) target = $region49
    $region48: #{tpu_custom_call.1} parent=1 // pred_region
      %s583 = ssub.s32 128, 128
      %584 = vsyncadd [#allocation4], %s583
      %s586 = sshll.u32 [#allocation3], 4
      %s587 = int_to_ptr.vmem [resolvable:$true] %s586
      %589 = dma.vmem_to_hbm [thread:$0]  %s587, 128, %s9, [#allocation4]
    $region49: #{tpu_custom_call.1} parent=1 // pred_fallthru
      _
    // Predicated region
    $region50: #{tpu_custom_call.1} parent=1 // pred_check
      _
    $region51: #{tpu_custom_call.1} parent=1 // pred_check_branch
      %591 = sbr.rel (0) target = $region53
    $region52: #{tpu_custom_call.1} parent=1 // pred_region
      %592 = dma.done [#allocation4], 128
    $region53: #{tpu_custom_call.1} parent=1 // pred_fallthru
      _
    %593 = vsyncpa [#allocation4], 1

</llo_original>
